<compile_context>
chip_gen: v5e
topology: v5e:2x2
jax: 0.10.0
libtpu: 0.0.40
codegen_flags: <defaults>
</compile_context>

<pallas_src>
import functools

import jax
import jax.numpy as jnp
from jax.experimental import pallas as pl
from jax.experimental.pallas import tpu as pltpu


def _round_up(n, m):
    return ((n + m - 1) // m) * m


def mlp_kernel(x_ref, w1_ref, b1_ref, w2_ref, b2_ref, w3_ref, b3_ref, o_ref):
    # One batch tile per grid step: 3 small MXU matmuls + bias adds + 2 VPU
    # ReLUs on native-width (sub-128 lane) operands; Mosaic handles the
    # internal MXU padding, so K/N of 16/32/4 cost the same native tile as 128.
    x = x_ref[...]
    h1 = jnp.dot(x, w1_ref[...], preferred_element_type=jnp.float32) + b1_ref[...]
    h1 = jnp.maximum(h1, 0.0)
    h2 = jnp.dot(h1, w2_ref[...], preferred_element_type=jnp.float32) + b2_ref[...]
    h2 = jnp.maximum(h2, 0.0)
    y = jnp.dot(h2, w3_ref[...], preferred_element_type=jnp.float32) + b3_ref[...]
    o_ref[...] = y.astype(o_ref.dtype)


@functools.partial(jax.jit, static_argnames=("tile_b",))
def mlp_forward(x, w1, b1, w2, b2, w3, b3, *, tile_b=4096):
    """x: [B, input_size]; wI: [in, out]; bI: [1, out]. Returns [B, output_size]."""
    B, in_f = x.shape
    h1_f = w1.shape[1]
    h2_f = w2.shape[1]
    out_f = w3.shape[1]

    x = x.astype(jnp.float32)
    w1 = w1.astype(jnp.float32)
    b1 = b1.astype(jnp.float32)
    w2 = w2.astype(jnp.float32)
    b2 = b2.astype(jnp.float32)
    w3 = w3.astype(jnp.float32)
    b3 = b3.astype(jnp.float32)

    # Batch tiling: multiple of 8 (sublane), capped at tile_b. If the whole
    # batch fits in one tile, split it in two so a v7x chip (2 TensorCores)
    # gets >= 2 parallel grid steps; on 1-TC v5e/v6e this is just 2 loop steps.
    b8 = _round_up(B, 8)
    tb = min(tile_b, b8)
    if tb >= b8 and b8 >= 16:
        tb = _round_up(b8 // 2, 8)
    b_pad = _round_up(b8, tb)

    # Only the batch axis is zero-padded (to a tile multiple); feature dims stay
    # at their native widths. Padded rows are sliced off below.
    xp = jnp.pad(x, ((0, b_pad - B), (0, 0))) if b_pad != B else x

    grid = (b_pad // tb,)
    resident = lambda i: (0, 0)  # weights/biases: same block every grid step.

    out = pl.pallas_call(
        mlp_kernel,
        out_shape=jax.ShapeDtypeStruct((b_pad, out_f), jnp.float32),
        grid=grid,
        in_specs=[
            pl.BlockSpec((tb, in_f), lambda i: (i, 0)),   # x: tiled over batch
            pl.BlockSpec((in_f, h1_f), resident),          # w1
            pl.BlockSpec((1, h1_f), resident),              # b1
            pl.BlockSpec((h1_f, h2_f), resident),           # w2
            pl.BlockSpec((1, h2_f), resident),               # b2
            pl.BlockSpec((h2_f, out_f), resident),           # w3
            pl.BlockSpec((1, out_f), resident),              # b3
        ],
        out_specs=pl.BlockSpec((tb, out_f), lambda i: (i, 0)),
        compiler_params=pltpu.CompilerParams(
            dimension_semantics=("parallel",)),  # shard batch tiles across TCs on v7x
    )(xp, w1, b1, w2, b2, w3, b3)

    return out[:B]


def init_linear_params(key, in_features, out_features):
    """Deterministic init mimicking nn.Linear default (uniform +/- 1/sqrt(in))."""
    k_w, k_b = jax.random.split(key)
    bound = 1.0 / (in_features ** 0.5)
    w = jax.random.uniform(k_w, (in_features, out_features), jnp.float32,
                           minval=-bound, maxval=bound)
    b = jax.random.uniform(k_b, (1, out_features), jnp.float32,
                           minval=-bound, maxval=bound)
    return w, b


def mlp_ref(x, w1, b1, w2, b2, w3, b3):
    h = jnp.maximum(x @ w1 + b1, 0.0)
    h = jnp.maximum(h @ w2 + b2, 0.0)
    return h @ w3 + b3


if __name__ == "__main__":
    # Shapes consistent with the module's forward:
    # input_size=16, hidden_size1=32, hidden_size2=32, output_size=4
    batch, input_size, hidden1, hidden2, output_size = 8, 16, 32, 32, 4

    key = jax.random.PRNGKey(0)
    kx, kxb, k1, k2, k3 = jax.random.split(key, 5)

    x = jax.random.normal(kx, (batch, input_size), jnp.float32)
    w1, b1 = init_linear_params(k1, input_size, hidden1)
    w2, b2 = init_linear_params(k2, hidden1, hidden2)
    w3, b3 = init_linear_params(k3, hidden2, output_size)

    # 1) Small batch (single tile / minimal grid).
    out = mlp_forward(x, w1, b1, w2, b2, w3, b3)
    out = jax.block_until_ready(out)
    ref = mlp_ref(x, w1, b1, w2, b2, w3, b3)
    assert out.shape == (batch, output_size)
    assert jnp.allclose(out, ref, atol=1e-5, rtol=1e-5)

    # 2) Larger, non-tile-aligned batch to exercise the batch grid, batch padding
    #    and weight residency across grid steps.
    big_batch = 300
    x_big = jax.random.normal(kxb, (big_batch, input_size), jnp.float32)
    out_big = mlp_forward(x_big, w1, b1, w2, b2, w3, b3, tile_b=128)
    out_big = jax.block_until_ready(out_big)
    ref_big = mlp_ref(x_big, w1, b1, w2, b2, w3, b3)
    assert out_big.shape == (big_batch, output_size)
    assert jnp.allclose(out_big, ref_big, atol=1e-5, rtol=1e-5)

    print("KERNEL_OK")
</pallas_src>

<mosaic_0001>
module attributes {stable_mosaic.version = 11 : i64} {
  func.func @mlp_kernel(%arg0: i32, %arg1: memref<8x16xf32, #tpu.memory_space<vmem>>, %arg2: memref<16x32xf32, #tpu.memory_space<vmem>>, %arg3: memref<1x32xf32, #tpu.memory_space<vmem>>, %arg4: memref<32x32xf32, #tpu.memory_space<vmem>>, %arg5: memref<1x32xf32, #tpu.memory_space<vmem>>, %arg6: memref<32x4xf32, #tpu.memory_space<vmem>>, %arg7: memref<1x4xf32, #tpu.memory_space<vmem>>, %arg8: memref<8x4xf32, #tpu.memory_space<vmem>>) attributes {dimension_semantics = [#tpu.dimension_semantics<parallel>], iteration_bounds = array<i64: 1>, scalar_prefetch = 0 : i64, scratch_operands = 0 : i64, tpu.core_type = #tpu.core_type<tc>, window_params = [{transform_indices = @transform_0, window_bounds = array<i64: 8, 16>}, {pipeline_mode = #tpu.pipeline_mode<synchronous>, transform_indices = @transform_1, window_bounds = array<i64: 16, 32>}, {pipeline_mode = #tpu.pipeline_mode<synchronous>, transform_indices = @transform_2, window_bounds = array<i64: 1, 32>}, {pipeline_mode = #tpu.pipeline_mode<synchronous>, transform_indices = @transform_3, window_bounds = array<i64: 32, 32>}, {pipeline_mode = #tpu.pipeline_mode<synchronous>, transform_indices = @transform_4, window_bounds = array<i64: 1, 32>}, {pipeline_mode = #tpu.pipeline_mode<synchronous>, transform_indices = @transform_5, window_bounds = array<i64: 32, 4>}, {pipeline_mode = #tpu.pipeline_mode<synchronous>, transform_indices = @transform_6, window_bounds = array<i64: 1, 4>}, {transform_indices = @transform_7, window_bounds = array<i64: 8, 4>}]} {
    %c0 = arith.constant 0 : index
    %c0_0 = arith.constant 0 : index
    %0 = vector.load %arg1[%c0, %c0_0] : memref<8x16xf32, #tpu.memory_space<vmem>>, vector<8x16xf32>
    %c0_1 = arith.constant 0 : index
    %c0_2 = arith.constant 0 : index
    %1 = vector.load %arg2[%c0_1, %c0_2] : memref<16x32xf32, #tpu.memory_space<vmem>>, vector<16x32xf32>
    %cst = arith.constant dense<0.000000e+00> : vector<8x32xf32>
    %2 = tpu.matmul %0, %1, %cst {dimension_numbers = #tpu.dot_dimension_numbers<[1], [0], [0], [1], [0, 0, 1, 1], [], []>} : vector<8x16xf32>, vector<16x32xf32>, vector<8x32xf32> -> vector<8x32xf32>
    %c0_3 = arith.constant 0 : index
    %c0_4 = arith.constant 0 : index
    %3 = vector.load %arg3[%c0_3, %c0_4] : memref<1x32xf32, #tpu.memory_space<vmem>>, vector<1x32xf32>
    %4 = vector.broadcast %3 : vector<1x32xf32> to vector<8x32xf32>
    %5 = arith.addf %2, %4 : vector<8x32xf32>
    %cst_5 = arith.constant 0.000000e+00 : f32
    %6 = vector.broadcast %cst_5 : f32 to vector<8x32xf32>
    %7 = arith.maximumf %5, %6 : vector<8x32xf32>
    %c0_6 = arith.constant 0 : index
    %c0_7 = arith.constant 0 : index
    %8 = vector.load %arg4[%c0_6, %c0_7] : memref<32x32xf32, #tpu.memory_space<vmem>>, vector<32x32xf32>
    %cst_8 = arith.constant dense<0.000000e+00> : vector<8x32xf32>
    %9 = tpu.matmul %7, %8, %cst_8 {dimension_numbers = #tpu.dot_dimension_numbers<[1], [0], [0], [1], [0, 0, 1, 1], [], []>} : vector<8x32xf32>, vector<32x32xf32>, vector<8x32xf32> -> vector<8x32xf32>
    %c0_9 = arith.constant 0 : index
    %c0_10 = arith.constant 0 : index
    %10 = vector.load %arg5[%c0_9, %c0_10] : memref<1x32xf32, #tpu.memory_space<vmem>>, vector<1x32xf32>
    %11 = vector.broadcast %10 : vector<1x32xf32> to vector<8x32xf32>
    %12 = arith.addf %9, %11 : vector<8x32xf32>
    %cst_11 = arith.constant 0.000000e+00 : f32
    %13 = vector.broadcast %cst_11 : f32 to vector<8x32xf32>
    %14 = arith.maximumf %12, %13 : vector<8x32xf32>
    %c0_12 = arith.constant 0 : index
    %c0_13 = arith.constant 0 : index
    %15 = vector.load %arg6[%c0_12, %c0_13] : memref<32x4xf32, #tpu.memory_space<vmem>>, vector<32x4xf32>
    %cst_14 = arith.constant dense<0.000000e+00> : vector<8x4xf32>
    %16 = tpu.matmul %14, %15, %cst_14 {dimension_numbers = #tpu.dot_dimension_numbers<[1], [0], [0], [1], [0, 0, 1, 1], [], []>} : vector<8x32xf32>, vector<32x4xf32>, vector<8x4xf32> -> vector<8x4xf32>
    %c0_15 = arith.constant 0 : index
    %c0_16 = arith.constant 0 : index
    %17 = vector.load %arg7[%c0_15, %c0_16] : memref<1x4xf32, #tpu.memory_space<vmem>>, vector<1x4xf32>
    %18 = vector.broadcast %17 : vector<1x4xf32> to vector<8x4xf32>
    %19 = arith.addf %16, %18 : vector<8x4xf32>
    %c0_17 = arith.constant 0 : index
    %c0_18 = arith.constant 0 : index
    %20 = vector.load %arg8[%c0_17, %c0_18] : memref<8x4xf32, #tpu.memory_space<vmem>>, vector<8x4xf32>
    tpu.vector_store %arg8[%c0_17, %c0_18], %19 {strides = array<i32>} : memref<8x4xf32, #tpu.memory_space<vmem>>, vector<8x4xf32>,
    return
  }
  func.func @transform_0(%arg0: i32) -> (i32, i32) {
    %c0_i32 = arith.constant 0 : i32
    %c0_i32_0 = arith.constant 0 : i32
    return %arg0, %c0_i32 : i32, i32
  }
  func.func @transform_1(%arg0: i32) -> (i32, i32) {
    %c0_i32 = arith.constant 0 : i32
    %c0_i32_0 = arith.constant 0 : i32
    %c0_i32_1 = arith.constant 0 : i32
    return %c0_i32, %c0_i32_0 : i32, i32
  }
  func.func @transform_2(%arg0: i32) -> (i32, i32) {
    %c0_i32 = arith.constant 0 : i32
    %c0_i32_0 = arith.constant 0 : i32
    %c0_i32_1 = arith.constant 0 : i32
    return %c0_i32, %c0_i32_0 : i32, i32
  }
  func.func @transform_3(%arg0: i32) -> (i32, i32) {
    %c0_i32 = arith.constant 0 : i32
    %c0_i32_0 = arith.constant 0 : i32
    %c0_i32_1 = arith.constant 0 : i32
    return %c0_i32, %c0_i32_0 : i32, i32
  }
  func.func @transform_4(%arg0: i32) -> (i32, i32) {
    %c0_i32 = arith.constant 0 : i32
    %c0_i32_0 = arith.constant 0 : i32
    %c0_i32_1 = arith.constant 0 : i32
    return %c0_i32, %c0_i32_0 : i32, i32
  }
  func.func @transform_5(%arg0: i32) -> (i32, i32) {
    %c0_i32 = arith.constant 0 : i32
    %c0_i32_0 = arith.constant 0 : i32
    %c0_i32_1 = arith.constant 0 : i32
    return %c0_i32, %c0_i32_0 : i32, i32
  }
  func.func @transform_6(%arg0: i32) -> (i32, i32) {
    %c0_i32 = arith.constant 0 : i32
    %c0_i32_0 = arith.constant 0 : i32
    %c0_i32_1 = arith.constant 0 : i32
    return %c0_i32, %c0_i32_0 : i32, i32
  }
  func.func @transform_7(%arg0: i32) -> (i32, i32) {
    %c0_i32 = arith.constant 0 : i32
    %c0_i32_0 = arith.constant 0 : i32
    return %arg0, %c0_i32 : i32, i32
  }
}

</mosaic_0001>

<llo_original>
// kernel: mlp_forward.1
$region0: #{mlp_forward.1}
  #allocation0 [shape = 'u32[]', space=smem, size = 0x4, offset = 0x4, fixed_abs, tag = 'smem constant byte address 0x4 - core index']
  #allocation1 [shape = 'u32[72,128]{1,0:T(1,128)}', space=vmem, size = 0x9000, scoped, tag = 'internal scratch']
  %s0 = inlined_call_operand.hbm [shape: f32[8,16], index: 0, kind: input, shape index: {}]
  %s1 = inlined_call_operand.hbm [shape: f32[16,32], index: 1, kind: input, shape index: {}]
  %s2 = inlined_call_operand.vmem [shape: f32[1,32], index: 2, kind: input, shape index: {}]
  %s3 = inlined_call_operand.vmem [shape: f32[32,32], index: 3, kind: input, shape index: {}]
  %s4 = inlined_call_operand.vmem [shape: f32[1,32], index: 4, kind: input, shape index: {}]
  %s5 = inlined_call_operand.vmem [shape: f32[32,4], index: 5, kind: input, shape index: {}]
  %s6 = inlined_call_operand.vmem [shape: f32[1,4], index: 6, kind: input, shape index: {}]
  %s7 = inlined_call_operand.vmem [shape: f32[8,4], index: 7, kind: output, shape index: {}]
  %s8 = sld [smem:[#allocation0]]
  $region46: #{mlp_forward.1} parent=0
    _
  %s10 = ssub.s32 1, %s8
  %s11 = scalar_select 0, %s10, %s8
  $region1: #{mlp_forward.1} parent=0
    #allocation2 [shape = 'u8[4096]{0}', space=vmem, size = 0x1000, scoped, tag = 'input window, operand 0, single buffered']
    #allocation3 [shape = 's32[1]{0}', space=sflag, size = 0x4, scoped, tag = 'scoped memory for mlp_forward.1']
    #allocation4 [shape = 'u8[8192]{0}', space=vmem, size = 0x2000, scoped, tag = 'input window, operand 1, single buffered']
    #allocation5 [shape = 's32[1]{0}', space=sflag, size = 0x4, scoped, tag = 'scoped memory for mlp_forward.1']
    %12 = vsyncpa [#allocation3], 0
    %13 = vsyncpa [#allocation5], 0
    // Predicated region
    $region2: #{mlp_forward.1} parent=1 // pred_check
      _
    $region3: #{mlp_forward.1} parent=1 // pred_check_branch
      %15 = sbr.rel (0) target = $region5
    $region4: #{mlp_forward.1} parent=1 // pred_region
      %17 = vsyncadd [#allocation3], 0
      %s19 = sshll.u32 %s0, 4
      %s20 = int_to_ptr.hbm [resolvable:$true] %s19
      %s21 = sshll.u32 [#allocation2], 4
      %s22 = int_to_ptr.vmem [resolvable:$true] %s21
      %24 = dma.hbm_to_vmem [thread:$0]  %s20, 128, %s22, [#allocation3]
    $region5: #{mlp_forward.1} parent=1 // pred_fallthru
      _
    // Predicated region
    $region6: #{mlp_forward.1} parent=1 // pred_check
      _
    $region7: #{mlp_forward.1} parent=1 // pred_check_branch
      %26 = sbr.rel (0) target = $region9
    $region8: #{mlp_forward.1} parent=1 // pred_region
      %28 = vsyncadd [#allocation5], 0
      %s29 = sshll.u32 %s1, 4
      %s30 = int_to_ptr.hbm [resolvable:$true] %s29
      %s31 = sshll.u32 [#allocation4], 4
      %s32 = int_to_ptr.vmem [resolvable:$true] %s31
      %37 = dma.hbm_to_vmem [thread:$0]  %s30, 256, %s32, [#allocation5], 128, 128, 8
    $region9: #{mlp_forward.1} parent=1 // pred_fallthru
      _
    // Predicated region
    $region10: #{mlp_forward.1} parent=1 // pred_check
      _
    $region11: #{mlp_forward.1} parent=1 // pred_check_branch
      %39 = sbr.rel (0) target = $region13
    $region12: #{mlp_forward.1} parent=1 // pred_region
      _
    $region13: #{mlp_forward.1} parent=1 // pred_fallthru
      _
    // Predicated region
    $region14: #{mlp_forward.1} parent=1 // pred_check
      _
    $region15: #{mlp_forward.1} parent=1 // pred_check_branch
      %41 = sbr.rel (0) target = $region17
    $region16: #{mlp_forward.1} parent=1 // pred_region
      _
    $region17: #{mlp_forward.1} parent=1 // pred_fallthru
      _
    // Predicated region
    $region18: #{mlp_forward.1} parent=1 // pred_check
      _
    $region19: #{mlp_forward.1} parent=1 // pred_check_branch
      %43 = sbr.rel (0) target = $region21
    $region20: #{mlp_forward.1} parent=1 // pred_region
      _
    $region21: #{mlp_forward.1} parent=1 // pred_fallthru
      _
    // Predicated region
    $region22: #{mlp_forward.1} parent=1 // pred_check
      _
    $region23: #{mlp_forward.1} parent=1 // pred_check_branch
      %45 = sbr.rel (0) target = $region25
    $region24: #{mlp_forward.1} parent=1 // pred_region
      _
    $region25: #{mlp_forward.1} parent=1 // pred_fallthru
      _
    // Predicated region
    $region26: #{mlp_forward.1} parent=1 // pred_check
      _
    $region27: #{mlp_forward.1} parent=1 // pred_check_branch
      %47 = sbr.rel (0) target = $region29
    $region28: #{mlp_forward.1} parent=1 // pred_region
      _
    $region29: #{mlp_forward.1} parent=1 // pred_fallthru
      _
    // Predicated region
    $region30: #{mlp_forward.1} parent=1 // pred_check
      _
    $region31: #{mlp_forward.1} parent=1 // pred_check_branch
      %49 = sbr.rel (0) target = $region33
    $region32: #{mlp_forward.1} parent=1 // pred_region
      %51 = dma.done [#allocation3], 128
    $region33: #{mlp_forward.1} parent=1 // pred_fallthru
      _
    // Predicated region
    $region34: #{mlp_forward.1} parent=1 // pred_check
      _
    $region35: #{mlp_forward.1} parent=1 // pred_check_branch
      %53 = sbr.rel (0) target = $region37
    $region36: #{mlp_forward.1} parent=1 // pred_region
      %55 = dma.done [#allocation5], 256
    $region37: #{mlp_forward.1} parent=1 // pred_fallthru
      _
    %v56 = vld [vmem:[#allocation2] sm:$0xff]
    %v57 = vld [vmem:[#allocation4] sm:$0xff]
    %v58 = vld [vmem:[#allocation4 + $0x8] sm:$0xff]
    %v59 = vld [vmem:[%s2] sm:$0x1]
    %v61 = vperm.slane %v59, 0
    %vm63 = vcmask 130048
    %v65 = vsel %vm63, %v56, 0
    %67 = vmatpush.msra.mxu0 0.0
    %68 = vmatpush.msra.mxu0 0.0
    %69 = vmatpush.msra.mxu0 0.0
    %70 = vmatpush.msra.mxu0 0.0
    %71 = vmatpush.msra.mxu0 0.0
    %72 = vmatpush.msra.mxu0 0.0
    %73 = vmatpush.msra.mxu0 0.0
    %74 = vmatpush.msra.mxu0 0.0
    %75 = vmatpush.msra.mxu0 0.0
    %76 = vmatpush.msra.mxu0 0.0
    %77 = vmatpush.msra.mxu0 0.0
    %78 = vmatpush.msra.mxu0 0.0
    %79 = vmatpush.msra.mxu0 0.0
    %80 = vmatpush.msra.mxu0 0.0
    %81 = vmatpush.msra.mxu0 %v58
    %82 = vmatpush.msra.mxu0 %v57
    %83 = vmatmul.f32.gmra.mxu0 %v65
    %v84 = vpop.f32.mrf.mxu0
    %v85 = vadd.f32 %v61, %v84
    %86 = vdwg.mxu0
    %v87 = vmax.f32 %v85, 0.0
    %v88 = vld [vmem:[%s3] sm:$0xff]
    %v89 = vld [vmem:[%s3 + $0x8] sm:$0xff]
    %v90 = vld [vmem:[%s3 + $0x10] sm:$0xff]
    %v91 = vld [vmem:[%s3 + $0x18] sm:$0xff]
    %v92 = vld [vmem:[%s4] sm:$0x1]
    %v94 = vperm.slane %v92, 0
    %vm96 = vcmask 261120
    %v98 = vsel %vm96, %v87, 0
    %100 = vmatpush.msra.mxu0 0.0
    %101 = vmatpush.msra.mxu0 0.0
    %102 = vmatpush.msra.mxu0 0.0
    %103 = vmatpush.msra.mxu0 0.0
    %104 = vmatpush.msra.mxu0 0.0
    %105 = vmatpush.msra.mxu0 0.0
    %106 = vmatpush.msra.mxu0 0.0
    %107 = vmatpush.msra.mxu0 0.0
    %108 = vmatpush.msra.mxu0 0.0
    %109 = vmatpush.msra.mxu0 0.0
    %110 = vmatpush.msra.mxu0 0.0
    %111 = vmatpush.msra.mxu0 0.0
    %112 = vmatpush.msra.mxu0 %v91
    %113 = vmatpush.msra.mxu0 %v90
    %114 = vmatpush.msra.mxu0 %v89
    %115 = vmatpush.msra.mxu0 %v88
    %116 = vmatmul.f32.gmra.mxu0 %v98
    %v117 = vpop.f32.mrf.mxu0
    %v118 = vadd.f32 %v94, %v117
    %119 = vdwg.mxu0
    %v120 = vmax.f32 %v118, 0.0
    %v121 = vld [vmem:[%s5] sm:$0xff]
    %v122 = vld [vmem:[%s5 + $0x8] sm:$0xff]
    %v123 = vld [vmem:[%s5 + $0x10] sm:$0xff]
    %v124 = vld [vmem:[%s5 + $0x18] sm:$0xff]
    %v125 = vld [vmem:[%s6] sm:$0x1]
    %v127 = vperm.slane %v125, 0
    %v130 = vsel %vm96, %v120, 0
    %132 = vmatpush.msra.mxu0 0.0
    %133 = vmatpush.msra.mxu0 0.0
    %134 = vmatpush.msra.mxu0 0.0
    %135 = vmatpush.msra.mxu0 0.0
    %136 = vmatpush.msra.mxu0 0.0
    %137 = vmatpush.msra.mxu0 0.0
    %138 = vmatpush.msra.mxu0 0.0
    %139 = vmatpush.msra.mxu0 0.0
    %140 = vmatpush.msra.mxu0 0.0
    %141 = vmatpush.msra.mxu0 0.0
    %142 = vmatpush.msra.mxu0 0.0
    %143 = vmatpush.msra.mxu0 0.0
    %144 = vmatpush.msra.mxu0 %v124
    %145 = vmatpush.msra.mxu0 %v123
    %146 = vmatpush.msra.mxu0 %v122
    %147 = vmatpush.msra.mxu0 %v121
    %148 = vmatmul.f32.gmra.mxu0 %v130
    %v149 = vpop.f32.mrf.mxu0
    %v150 = vadd.f32 %v127, %v149
    %151 = vdwg.mxu0
    %vm152 = vcmask 31744
    %153 = vst.msk [vmem:[%s7] sm:$0xff] %vm152, %v150
    // Predicated region
    $region38: #{mlp_forward.1} parent=1 // pred_check
      _
    $region39: #{mlp_forward.1} parent=1 // pred_check_branch
      %155 = sbr.rel (0) target = $region41
    $region40: #{mlp_forward.1} parent=1 // pred_region
      _
    $region41: #{mlp_forward.1} parent=1 // pred_fallthru
      _
    // Predicated region
    $region42: #{mlp_forward.1} parent=1 // pred_check
      _
    $region43: #{mlp_forward.1} parent=1 // pred_check_branch
      %157 = sbr.rel (0) target = $region45
    $region44: #{mlp_forward.1} parent=1 // pred_region
      _
    $region45: #{mlp_forward.1} parent=1 // pred_fallthru
      _
    %158 = vsyncpa [#allocation3], 1
    %159 = vsyncpa [#allocation5], 1

</llo_original>
